<compile_context>
chip_gen: v7x
topology: tpu7x:2x2x1
jax: 0.10.0
libtpu: 0.0.40
codegen_flags: <defaults>
</compile_context>

<pallas_src>
import functools
import math

import jax
import jax.numpy as jnp
from jax.experimental import pallas as pl
from jax.experimental.pallas import tpu as pltpu


# ---------------------------------------------------------------------------
# Pallas kernel: fused per-pixel MLP over a (Cin, tm) lane-dense tile.
# ---------------------------------------------------------------------------
def _ffn_kernel(*refs, simplegate, act):
    if simplegate:
        (x_ref, w1a_ref, b1a_ref, w1b_ref, b1b_ref, w2_ref, b2_ref, o_ref) = refs
    else:
        (x_ref, w1_ref, b1_ref, w2_ref, b2_ref, o_ref) = refs

    # Compute dtype follows the weights: f32 for small channel counts
    # (exact vs the PyTorch f32 reference), bf16 only on the large-MXU path.
    cdt = w2_ref.dtype
    x = x_ref[...].astype(cdt)                                     # (Cin, tm)

    if simplegate:
        h1 = jnp.dot(w1a_ref[...], x, preferred_element_type=jnp.float32)
        h2 = jnp.dot(w1b_ref[...], x, preferred_element_type=jnp.float32)
        a = (h1 + b1a_ref[...]) * (h2 + b1b_ref[...])              # SimpleGate
    else:
        h = jnp.dot(w1_ref[...], x, preferred_element_type=jnp.float32)
        h = h + b1_ref[...]                                        # f32 epilogue
        if act == "silu":
            a = h * jax.nn.sigmoid(h)                              # SiLU (EUP)
        elif act is None or act in ("none", "identity"):
            a = h
        else:
            raise NotImplementedError(f"act_func {act!r} not supported")

    y = jnp.dot(w2_ref[...], a.astype(cdt),
                preferred_element_type=jnp.float32)                # (Cin, tm)
    y = y + b2_ref[...]
    # TODO(synk): training-mode Dropout(p>0) would need pltpu.prng_* masking.
    o_ref[...] = y.astype(o_ref.dtype)


# ---------------------------------------------------------------------------
# Tiling
# ---------------------------------------------------------------------------
def _pick_tile(hw, n_batch, per_lane_bytes, *, budget=8 << 20, max_lanes=8192):
    """Pick the spatial (lane) tile size tm.

    * multiple of 128 (or the full extent when hw <= 128),
    * per-step live bytes (double-buffered I/O + f32 temporaries) stay under
      `budget` -> far inside even v7x's 64 MiB VMEM and default scoped limits,
    * capped at `max_lanes` (512-1024 lanes already reach ~85% HBM roofline),
    * shrunk if needed so the (B, cdiv(HW, tm)) grid has >= 2 steps, keeping
      both v7x TensorCores busy.
    """
    if hw <= 128:
        return hw  # block must equal the full (non-128-divisible) extent
    cap = (budget // max(per_lane_bytes, 1)) // 128 * 128
    cap = max(128, min(max_lanes, cap))
    tm = min(cap, (hw // 128) * 128)
    while n_batch * ((hw + tm - 1) // tm) < 2 and tm > 128:
        tm = max(128, (tm // 2 + 127) // 128 * 128)
    return tm


# ---------------------------------------------------------------------------
# Module wrapper
# ---------------------------------------------------------------------------
def channel_process_block(x, w1, b1, w2, b2, *, simplegate=False, act="silu",
                          out_dtype=None, use_bf16_mxu=None, interpret=False):
    """x: (B, Cin, H, W) NCHW -> (B, Cin, H, W)."""
    B, Cin, H, W = x.shape
    hidden = w1.shape[0]
    HW = H * W
    out_dtype = x.dtype if out_dtype is None else jnp.dtype(out_dtype)
    xf = x.reshape(B, Cin, HW)          # free reshape, NCHW stays contiguous

    # bf16 MXU path only pays off (and only matters) for big channel counts;
    # the default tiny-channel config stays f32 end-to-end for exactness.
    if use_bf16_mxu is None:
        use_bf16_mxu = (Cin >= 128 and hidden >= 128)
    wdt = jnp.bfloat16 if use_bf16_mxu else jnp.float32
    w1c = w1.astype(wdt)
    w2c = w2.astype(wdt)
    b1c = b1.reshape(hidden, 1).astype(jnp.float32)
    b2c = b2.reshape(Cin, 1).astype(jnp.float32)

    # VMEM-aware lane tile: live bytes per lane each grid step.
    x_b = xf.dtype.itemsize
    o_b = out_dtype.itemsize
    wdt_b = jnp.dtype(wdt).itemsize
    per_lane = 2 * Cin * (x_b + o_b)              # double-buffered in/out slabs
    per_lane += hidden * (2 * 4 + wdt_b)          # h, a (f32) + cast temp
    tm = _pick_tile(HW, B, per_lane)
    grid = (B, pl.cdiv(HW, tm))                   # partial tail block is masked

    if simplegate:
        half = hidden // 2
        args = (xf, w1c[:half], b1c[:half], w1c[half:], b1c[half:], w2c, b2c)
    else:
        args = (xf, w1c, b1c, w2c, b2c)

    def wspec(shape):
        return pl.BlockSpec(tuple(shape), lambda b, m: (0, 0))

    x_spec = pl.BlockSpec((None, Cin, tm), lambda b, m: (b, 0, m))
    o_spec = pl.BlockSpec((None, Cin, tm), lambda b, m: (b, 0, m))
    w_specs = [wspec(a.shape) for a in args[1:]]

    # Scoped-VMEM limit derived from the tile, with headroom (default is only
    # 16 MiB on v5e / 32 MiB on v6e & v7x).
    weight_bytes = sum(int(a.size) * a.dtype.itemsize for a in args[1:])
    tile_bytes = per_lane * tm + 2 * weight_bytes
    vmem_limit = int(min(max(tile_bytes * 1.5, 32 << 20), 48 << 20))

    kernel = functools.partial(_ffn_kernel, simplegate=simplegate, act=act)

    out = pl.pallas_call(
        kernel,
        out_shape=jax.ShapeDtypeStruct((B, Cin, HW), out_dtype),
        grid_spec=pltpu.PrefetchScalarGridSpec(
            num_scalar_prefetch=0,
            grid=grid,
            in_specs=[x_spec] + w_specs,
            out_specs=o_spec,
        ),
        compiler_params=pltpu.CompilerParams(
            dimension_semantics=("parallel", "parallel"),
            vmem_limit_bytes=vmem_limit,
        ),
        interpret=interpret,
    )(*args)

    return out.reshape(B, Cin, H, W)


def init_params(key, in_channels, hidden_rate, *, simplegate=False):
    """Mirror PyTorch Conv2d(k=1) default init: U(-1/sqrt(fan_in), +)."""
    hidden = int(in_channels * hidden_rate)
    k1, k2, k3, k4 = jax.random.split(key, 4)
    bound1 = 1.0 / math.sqrt(in_channels)
    w1 = jax.random.uniform(k1, (hidden, in_channels), jnp.float32, -bound1, bound1)
    b1 = jax.random.uniform(k2, (hidden, 1), jnp.float32, -bound1, bound1)
    c2_in = hidden // 2 if simplegate else hidden
    bound2 = 1.0 / math.sqrt(c2_in)
    w2 = jax.random.uniform(k3, (in_channels, c2_in), jnp.float32, -bound2, bound2)
    b2 = jax.random.uniform(k4, (in_channels, 1), jnp.float32, -bound2, bound2)
    return w1, b1, w2, b2


# TODO(synk): depthwise_conv_module=True variant (3x3 depthwise conv) is not
# implemented here; it needs spatial halo handling and is a separate kernel.

if __name__ == "__main__":
    key = jax.random.PRNGKey(0)
    k_x, k_w, k_wg = jax.random.split(key, 3)

    # Default config: in_channels=4, hidden_rate=2 -> hidden=8, SiLU, dropout=0
    B, Cin, hidden_rate, H, W = 2, 4, 2, 16, 16
    x = jax.random.normal(k_x, (B, Cin, H, W), jnp.float32)
    w1, b1, w2, b2 = init_params(k_w, Cin, hidden_rate)

    out = channel_process_block(x, w1, b1, w2, b2)
    jax.block_until_ready(out)
    assert out.shape == (B, Cin, H, W), out.shape
    assert out.dtype == jnp.float32

    # Plain-JAX reference of the same forward pass (f32 end-to-end).
    ref_h = jnp.einsum("oc,bchw->bohw", w1, x) + b1.reshape(1, -1, 1, 1)
    ref_a = ref_h * jax.nn.sigmoid(ref_h)
    ref = jnp.einsum("oc,bchw->bohw", w2, ref_a) + b2.reshape(1, -1, 1, 1)
    err = float(jnp.max(jnp.abs(out - ref)))
    assert jnp.allclose(out, ref, atol=1e-4, rtol=1e-4), err

    # SimpleGate variant (ffn_simplegate=True); B=1 also exercises the
    # ">=2 grid steps" megacore tiling path.
    w1g, b1g, w2g, b2g = init_params(k_wg, Cin, hidden_rate, simplegate=True)
    xg = x[:1]
    outg = channel_process_block(xg, w1g, b1g, w2g, b2g, simplegate=True)
    jax.block_until_ready(outg)
    hg = jnp.einsum("oc,bchw->bohw", w1g, xg) + b1g.reshape(1, -1, 1, 1)
    half = hg.shape[1] // 2
    ag = hg[:, :half] * hg[:, half:]
    refg = jnp.einsum("oc,bchw->bohw", w2g, ag) + b2g.reshape(1, -1, 1, 1)
    errg = float(jnp.max(jnp.abs(outg - refg)))
    assert jnp.allclose(outg, refg, atol=1e-4, rtol=1e-4), errg

    print("KERNEL_OK")
</pallas_src>

<mosaic_0001>
module attributes {stable_mosaic.version = 11 : i64} {
  func.func @_ffn_kernel(%arg0: i32, %arg1: i32, %arg2: memref<1x4x256xf32, #tpu.memory_space<vmem>>, %arg3: memref<8x4xf32, #tpu.memory_space<vmem>>, %arg4: memref<8x1xf32, #tpu.memory_space<vmem>>, %arg5: memref<4x8xf32, #tpu.memory_space<vmem>>, %arg6: memref<4x1xf32, #tpu.memory_space<vmem>>, %arg7: memref<1x4x256xf32, #tpu.memory_space<vmem>>) attributes {dimension_semantics = [#tpu.dimension_semantics<parallel>, #tpu.dimension_semantics<parallel>], iteration_bounds = array<i64: 2, 1>, scalar_prefetch = 0 : i64, scratch_operands = 0 : i64, tpu.core_type = #tpu.core_type<tc>, window_params = [{transform_indices = @transform_0, window_bounds = array<i64: 1, 4, 256>}, {pipeline_mode = #tpu.pipeline_mode<synchronous>, transform_indices = @transform_1, window_bounds = array<i64: 8, 4>}, {pipeline_mode = #tpu.pipeline_mode<synchronous>, transform_indices = @transform_2, window_bounds = array<i64: 8, 1>}, {pipeline_mode = #tpu.pipeline_mode<synchronous>, transform_indices = @transform_3, window_bounds = array<i64: 4, 8>}, {pipeline_mode = #tpu.pipeline_mode<synchronous>, transform_indices = @transform_4, window_bounds = array<i64: 4, 1>}, {transform_indices = @transform_5, window_bounds = array<i64: 1, 4, 256>}]} {
    %c0 = arith.constant 0 : index
    %c0_0 = arith.constant 0 : index
    %c0_1 = arith.constant 0 : index
    %0 = vector.load %arg2[%c0, %c0_0, %c0_1] : memref<1x4x256xf32, #tpu.memory_space<vmem>>, vector<1x4x256xf32>
    %1 = vector.shape_cast %0 : vector<1x4x256xf32> to vector<4x256xf32>
    %c0_2 = arith.constant 0 : index
    %c0_3 = arith.constant 0 : index
    %2 = vector.load %arg3[%c0_2, %c0_3] : memref<8x4xf32, #tpu.memory_space<vmem>>, vector<8x4xf32>
    %cst = arith.constant dense<0.000000e+00> : vector<8x256xf32>
    %3 = tpu.matmul %2, %1, %cst {dimension_numbers = #tpu.dot_dimension_numbers<[1], [0], [0], [1], [0, 0, 1, 1], [], []>} : vector<8x4xf32>, vector<4x256xf32>, vector<8x256xf32> -> vector<8x256xf32>
    %c0_4 = arith.constant 0 : index
    %c0_5 = arith.constant 0 : index
    %4 = vector.load %arg4[%c0_4, %c0_5] : memref<8x1xf32, #tpu.memory_space<vmem>>, vector<8x1xf32>
    %5 = vector.broadcast %4 : vector<8x1xf32> to vector<8x256xf32>
    %6 = arith.addf %3, %5 : vector<8x256xf32>
    %7 = arith.negf %6 : vector<8x256xf32>
    %8 = math.exp %7 : vector<8x256xf32>
    %cst_6 = arith.constant 1.000000e+00 : f32
    %9 = vector.broadcast %cst_6 : f32 to vector<8x256xf32>
    %10 = arith.addf %9, %8 : vector<8x256xf32>
    %11 = arith.divf %9, %10 : vector<8x256xf32>
    %12 = arith.mulf %6, %11 : vector<8x256xf32>
    %c0_7 = arith.constant 0 : index
    %c0_8 = arith.constant 0 : index
    %13 = vector.load %arg5[%c0_7, %c0_8] : memref<4x8xf32, #tpu.memory_space<vmem>>, vector<4x8xf32>
    %cst_9 = arith.constant dense<0.000000e+00> : vector<4x256xf32>
    %14 = tpu.matmul %13, %12, %cst_9 {dimension_numbers = #tpu.dot_dimension_numbers<[1], [0], [0], [1], [0, 0, 1, 1], [], []>} : vector<4x8xf32>, vector<8x256xf32>, vector<4x256xf32> -> vector<4x256xf32>
    %c0_10 = arith.constant 0 : index
    %c0_11 = arith.constant 0 : index
    %15 = vector.load %arg6[%c0_10, %c0_11] : memref<4x1xf32, #tpu.memory_space<vmem>>, vector<4x1xf32>
    %16 = vector.broadcast %15 : vector<4x1xf32> to vector<4x256xf32>
    %17 = arith.addf %14, %16 : vector<4x256xf32>
    %c0_12 = arith.constant 0 : index
    %c0_13 = arith.constant 0 : index
    %c0_14 = arith.constant 0 : index
    %18 = vector.load %arg7[%c0_12, %c0_13, %c0_14] : memref<1x4x256xf32, #tpu.memory_space<vmem>>, vector<1x4x256xf32>
    %19 = vector.shape_cast %18 : vector<1x4x256xf32> to vector<4x256xf32>
    %20 = vector.shape_cast %17 : vector<4x256xf32> to vector<1x4x256xf32>
    tpu.vector_store %arg7[%c0_12, %c0_13, %c0_14], %20 {strides = array<i32>} : memref<1x4x256xf32, #tpu.memory_space<vmem>>, vector<1x4x256xf32>,
    return
  }
  func.func @transform_0(%arg0: i32, %arg1: i32) -> (i32, i32, i32) {
    %c0_i32 = arith.constant 0 : i32
    %c0_i32_0 = arith.constant 0 : i32
    return %arg0, %c0_i32, %arg1 : i32, i32, i32
  }
  func.func @transform_1(%arg0: i32, %arg1: i32) -> (i32, i32) {
    %c0_i32 = arith.constant 0 : i32
    %c0_i32_0 = arith.constant 0 : i32
    %c0_i32_1 = arith.constant 0 : i32
    return %c0_i32, %c0_i32_0 : i32, i32
  }
  func.func @transform_2(%arg0: i32, %arg1: i32) -> (i32, i32) {
    %c0_i32 = arith.constant 0 : i32
    %c0_i32_0 = arith.constant 0 : i32
    %c0_i32_1 = arith.constant 0 : i32
    return %c0_i32, %c0_i32_0 : i32, i32
  }
  func.func @transform_3(%arg0: i32, %arg1: i32) -> (i32, i32) {
    %c0_i32 = arith.constant 0 : i32
    %c0_i32_0 = arith.constant 0 : i32
    %c0_i32_1 = arith.constant 0 : i32
    return %c0_i32, %c0_i32_0 : i32, i32
  }
  func.func @transform_4(%arg0: i32, %arg1: i32) -> (i32, i32) {
    %c0_i32 = arith.constant 0 : i32
    %c0_i32_0 = arith.constant 0 : i32
    %c0_i32_1 = arith.constant 0 : i32
    return %c0_i32, %c0_i32_0 : i32, i32
  }
  func.func @transform_5(%arg0: i32, %arg1: i32) -> (i32, i32, i32) {
    %c0_i32 = arith.constant 0 : i32
    %c0_i32_0 = arith.constant 0 : i32
    return %arg0, %c0_i32, %arg1 : i32, i32, i32
  }
}

</mosaic_0001>

<llo_original>
// kernel: tpu_custom_call.1
$region0: #{tpu_custom_call.1}
  #allocation0 [shape = 'u32[]', space=smem, size = 0x4, offset = 0x4, fixed_abs, tag = 'smem constant byte address 0x4 - core index']
  #allocation1 [shape = 'u32[144,128]{1,0:T(1,128)}', space=vmem, size = 0x12000, scoped, tag = 'internal scratch']
  %s0 = inlined_call_operand.vmem [shape: f32[2,4,256], index: 0, kind: input, shape index: {}]
  %s1 = inlined_call_operand.vmem [shape: f32[8,4], index: 1, kind: input, shape index: {}]
  %s2 = inlined_call_operand.vmem [shape: f32[8,1], index: 2, kind: input, shape index: {}]
  %s3 = inlined_call_operand.vmem [shape: f32[4,8], index: 3, kind: input, shape index: {}]
  %s4 = inlined_call_operand.vmem [shape: f32[4,1], index: 4, kind: input, shape index: {}]
  %s5 = inlined_call_operand.hbm [shape: f32[2,4,256], index: 5, kind: output, shape index: {}]
  %s6 = sld [smem:[#allocation0]]
  $region53: #{tpu_custom_call.1} parent=0
    _
  %s8 = ssub.s32 1, %s6
  %s9 = scalar_select 0, %s8, %s6
  $region1: #{tpu_custom_call.1} parent=0
    #allocation2 [shape = 'u8[8192]{0}', space=vmem, size = 0x2000, scoped, tag = 'output window, operand 0']
    #allocation3 [shape = 's32[2]{0}', space=sflag, size = 0x8, scoped, tag = 'scoped memory for tpu_custom_call.1']
    %10 = vsyncpa [#allocation3], 0
    %s11 = scalar_lea.sflag [#allocation3], 1
    %12 = vsyncpa %s11, 0
    loop: start=0, step=1, limit=4
    $region2: #{tpu_custom_call.1} parent=1 // loop_pre_header
      _
    $region3: #{tpu_custom_call.1} parent=1 // loop_header
      %s14 = sphi 0, %s18
      %p15 = scmp.ge.s32.totalorder %s14, 4
      %s21 = sphi 0, %s33
      %s22 = sphi 0, %s29
      %s23 = sphi 0, %s21
      %s24 = sphi 0, %s22
      %s25 = sphi 0, %s23
      %s26 = sphi 0, %s24
      %s38 = sphi 0, %s40
      %s41 = sphi 0, %s38
      %s42 = sphi 0, %s41
      %s58 = sphi 0, %s42
      %s62 = sphi 0, %s62
      %s64 = sphi 0, %s62
      %s65 = sphi 0, %s64
      %s79 = sphi 0, %s65
      %s83 = sphi 0, %s83
      %s85 = sphi 0, %s83
      %s86 = sphi 0, %s85
      %s100 = sphi 0, %s86
      %s104 = sphi 0, %s104
      %s106 = sphi 0, %s104
      %s107 = sphi 0, %s106
      %s121 = sphi 0, %s107
      %s125 = sphi 0, %s125
      %s127 = sphi 0, %s125
      %s128 = sphi 0, %s127
      %s142 = sphi 0, %s128
      %s150 = sphi 0, %s152
      %s153 = sphi 0, %s150
      %s154 = sphi 0, %s153
      %s170 = sphi 0, %s154
    $region4: #{tpu_custom_call.1} parent=1 // loop_header_branch
      %17 = sbr.rel (%p15) target = $region8
    $region5: #{tpu_custom_call.1} parent=1 // loop_body
      %s19 = ssub.s32 %s14, 1
      %s20 = ssub.s32 %s14, 2
      %s27 = sadd.s32 1, %s22
      %p28 = scmp.ge.s32.totalorder %s27, 1
      %s29 = scalar_select %p28, 0, %s27
      %s30 = sadd.s32 1, %s21
      %s31 = scalar_select %p28, %s30, %s21
      %p32 = scmp.ge.s32.totalorder %s31, 2
      %s33 = scalar_select %p32, 0, %s31
      %s34 = ssub.s32 %s21, %s33
      %s35 = ssub.s32 %s22, %s29
      %s36 = sor.u32 %s34, %s35
      %p37 = scmp.eq.s32.totalorder %s36, 0
      %s39 = sadd.s32 %s38, 1
      %s40 = scalar_select %p37, %s38, %s39
      %p43 = pneg %p37
      %p44 = scmp.eq.s32.totalorder %s14, 1
      %p45 = por %p43, %p44
      %p46 = scmp.ne.s32.totalorder %s38, %s41
      %p47 = scmp.eq.s32.totalorder %s14, 0
      %p48 = por %p46, %p47
      %p49 = scmp.ne.s32.totalorder %s38, %s41
      %p50 = scmp.eq.s32.totalorder %s19, 1
      %p51 = por %p49, %p50
      %p52 = scmp.ne.s32.totalorder %s41, %s42
      %p53 = scmp.eq.s32.totalorder %s19, 0
      %p54 = por %p52, %p53
      %p55 = scmp.ne.s32.totalorder %s41, %s42
      %p56 = scmp.eq.s32.totalorder %s20, 1
      %p57 = por %p55, %p56
      %p59 = scmp.ne.s32.totalorder %s42, %s58
      %p60 = scmp.eq.s32.totalorder %s20, 0
      %p61 = por %p59, %p60
      %s63 = sadd.s32 %s62, 1
      %p66 = scmp.eq.s32.totalorder %s14, 1
      %p67 = scmp.ne.s32.totalorder %s62, %s64
      %p68 = scmp.eq.s32.totalorder %s14, 0
      %p69 = por %p67, %p68
      %p70 = scmp.ne.s32.totalorder %s62, %s64
      %p71 = scmp.eq.s32.totalorder %s19, 1
      %p72 = por %p70, %p71
      %p73 = scmp.ne.s32.totalorder %s64, %s65
      %p74 = scmp.eq.s32.totalorder %s19, 0
      %p75 = por %p73, %p74
      %p76 = scmp.ne.s32.totalorder %s64, %s65
      %p77 = scmp.eq.s32.totalorder %s20, 1
      %p78 = por %p76, %p77
      %p80 = scmp.ne.s32.totalorder %s65, %s79
      %p81 = scmp.eq.s32.totalorder %s20, 0
      %p82 = por %p80, %p81
      %s84 = sadd.s32 %s83, 1
      %p87 = scmp.eq.s32.totalorder %s14, 1
      %p88 = scmp.ne.s32.totalorder %s83, %s85
      %p89 = scmp.eq.s32.totalorder %s14, 0
      %p90 = por %p88, %p89
      %p91 = scmp.ne.s32.totalorder %s83, %s85
      %p92 = scmp.eq.s32.totalorder %s19, 1
      %p93 = por %p91, %p92
      %p94 = scmp.ne.s32.totalorder %s85, %s86
      %p95 = scmp.eq.s32.totalorder %s19, 0
      %p96 = por %p94, %p95
      %p97 = scmp.ne.s32.totalorder %s85, %s86
      %p98 = scmp.eq.s32.totalorder %s20, 1
      %p99 = por %p97, %p98
      %p101 = scmp.ne.s32.totalorder %s86, %s100
      %p102 = scmp.eq.s32.totalorder %s20, 0
      %p103 = por %p101, %p102
      %s105 = sadd.s32 %s104, 1
      %p108 = scmp.eq.s32.totalorder %s14, 1
      %p109 = scmp.ne.s32.totalorder %s104, %s106
      %p110 = scmp.eq.s32.totalorder %s14, 0
      %p111 = por %p109, %p110
      %p112 = scmp.ne.s32.totalorder %s104, %s106
      %p113 = scmp.eq.s32.totalorder %s19, 1
      %p114 = por %p112, %p113
      %p115 = scmp.ne.s32.totalorder %s106, %s107
      %p116 = scmp.eq.s32.totalorder %s19, 0
      %p117 = por %p115, %p116
      %p118 = scmp.ne.s32.totalorder %s106, %s107
      %p119 = scmp.eq.s32.totalorder %s20, 1
      %p120 = por %p118, %p119
      %p122 = scmp.ne.s32.totalorder %s107, %s121
      %p123 = scmp.eq.s32.totalorder %s20, 0
      %p124 = por %p122, %p123
      %s126 = sadd.s32 %s125, 1
      %p129 = scmp.eq.s32.totalorder %s14, 1
      %p130 = scmp.ne.s32.totalorder %s125, %s127
      %p131 = scmp.eq.s32.totalorder %s14, 0
      %p132 = por %p130, %p131
      %p133 = scmp.ne.s32.totalorder %s125, %s127
      %p134 = scmp.eq.s32.totalorder %s19, 1
      %p135 = por %p133, %p134
      %p136 = scmp.ne.s32.totalorder %s127, %s128
      %p137 = scmp.eq.s32.totalorder %s19, 0
      %p138 = por %p136, %p137
      %p139 = scmp.ne.s32.totalorder %s127, %s128
      %p140 = scmp.eq.s32.totalorder %s20, 1
      %p141 = por %p139, %p140
      %p143 = scmp.ne.s32.totalorder %s128, %s142
      %p144 = scmp.eq.s32.totalorder %s20, 0
      %p145 = por %p143, %p144
      %s146 = ssub.s32 %s21, %s33
      %s147 = ssub.s32 %s22, %s29
      %s148 = sor.u32 %s146, %s147
      %p149 = scmp.eq.s32.totalorder %s148, 0
      %s151 = sadd.s32 %s150, 1
      %s152 = scalar_select %p149, %s150, %s151
      %p155 = pneg %p149
      %p156 = scmp.eq.s32.totalorder %s14, 1
      %p157 = por %p155, %p156
      %p158 = scmp.ne.s32.totalorder %s150, %s153
      %p159 = scmp.eq.s32.totalorder %s14, 0
      %p160 = por %p158, %p159
      %p161 = scmp.ne.s32.totalorder %s150, %s153
      %p162 = scmp.eq.s32.totalorder %s19, 1
      %p163 = por %p161, %p162
      %p164 = scmp.ne.s32.totalorder %s153, %s154
      %p165 = scmp.eq.s32.totalorder %s19, 0
      %p166 = por %p164, %p165
      %p167 = scmp.ne.s32.totalorder %s153, %s154
      %p168 = scmp.eq.s32.totalorder %s20, 1
      %p169 = por %p167, %p168
      %p171 = scmp.ne.s32.totalorder %s154, %s170
      %p172 = scmp.eq.s32.totalorder %s20, 0
      %p173 = por %p171, %p172
      %p174 = scmp.le.s32.totalorder 1, %s14
      %p175 = scmp.lt.s32.totalorder %s14, 3
      %p176 = pnand %p174, %p175
      %p177 = pneg %p176
      // Predicated region
      $region9: #{tpu_custom_call.1} parent=5 // pred_check
        _
      $region10: #{tpu_custom_call.1} parent=5 // pred_check_branch
        %179 = sbr.rel (%p176) target = $region12
      $region11: #{tpu_custom_call.1} parent=5 // pred_region
        %s180 = ssub.s32 %s14, 1
        // Predicated region
        $region13: #{tpu_custom_call.1} parent=11 // pred_check
          %p181 = pneg %p75
        $region14: #{tpu_custom_call.1} parent=11 // pred_check_branch
          %183 = sbr.rel (%p181) target = $region16
        $region15: #{tpu_custom_call.1} parent=11 // pred_region
          _
        $region16: #{tpu_custom_call.1} parent=11 // pred_fallthru
          _
        // Predicated region
        $region17: #{tpu_custom_call.1} parent=11 // pred_check
          %p184 = pneg %p96
        $region18: #{tpu_custom_call.1} parent=11 // pred_check_branch
          %186 = sbr.rel (%p184) target = $region20
        $region19: #{tpu_custom_call.1} parent=11 // pred_region
          _
        $region20: #{tpu_custom_call.1} parent=11 // pred_fallthru
          _
        // Predicated region
        $region21: #{tpu_custom_call.1} parent=11 // pred_check
          %p187 = pneg %p117
        $region22: #{tpu_custom_call.1} parent=11 // pred_check_branch
          %189 = sbr.rel (%p187) target = $region24
        $region23: #{tpu_custom_call.1} parent=11 // pred_region
          _
        $region24: #{tpu_custom_call.1} parent=11 // pred_fallthru
          _
        // Predicated region
        $region25: #{tpu_custom_call.1} parent=11 // pred_check
          %p190 = pneg %p138
        $region26: #{tpu_custom_call.1} parent=11 // pred_check_branch
          %192 = sbr.rel (%p190) target = $region28
        $region27: #{tpu_custom_call.1} parent=11 // pred_region
          _
        $region28: #{tpu_custom_call.1} parent=11 // pred_fallthru
          _
      $region12: #{tpu_custom_call.1} parent=5 // pred_fallthru
        _
      %p193 = scmp.lt.s32.totalorder %s14, 2
      // Predicated region
      $region29: #{tpu_custom_call.1} parent=5 // pred_check
        %p194 = pneg %p193
      $region30: #{tpu_custom_call.1} parent=5 // pred_check_branch
        %196 = sbr.rel (%p194) target = $region32
      $region31: #{tpu_custom_call.1} parent=5 // pred_region
        // Predicated region
        $region33: #{tpu_custom_call.1} parent=31 // pred_check
          %p197 = pneg %p48
        $region34: #{tpu_custom_call.1} parent=31 // pred_check_branch
          %199 = sbr.rel (%p197) target = $region36
        $region35: #{tpu_custom_call.1} parent=31 // pred_region
          %s200 = smul.u32 2, %s22
          %p201 = scmp.lt.s32.totalorder %s21, 1
          %s202 = scalar_select %p201, %s21, 1
          %p203 = scmp.lt.s32.totalorder %s200, 1
          %s204 = scalar_select %p203, %s200, 1
          %s205 = smul.addr %s202, 2
          %s206 = sadd.s32 %s204, %s205
          %s207 = smul.addr %s206, 4
          %s208 = scalar_lea.vmem %s0, %s207
          %s209 = smul.u32 2, %s22
        $region36: #{tpu_custom_call.1} parent=31 // pred_fallthru
          _
      $region32: #{tpu_custom_call.1} parent=5 // pred_fallthru
        _
      %p210 = scmp.le.s32.totalorder 1, %s14
      %p211 = scmp.lt.s32.totalorder %s14, 3
      %p212 = pnand %p210, %p211
      %p213 = pneg %p212
      // Predicated region
      $region37: #{tpu_custom_call.1} parent=5 // pred_check
        _
      $region38: #{tpu_custom_call.1} parent=5 // pred_check_branch
        %215 = sbr.rel (%p212) target = $region40
      $region39: #{tpu_custom_call.1} parent=5 // pred_region
        %s216 = ssub.s32 %s14, 1
        %s217 = smul.u32 2, %s24
        %p218 = scmp.lt.s32.totalorder %s23, 1
        %s219 = scalar_select %p218, %s23, 1
        %p220 = scmp.lt.s32.totalorder %s217, 1
        %s221 = scalar_select %p220, %s217, 1
        %s222 = smul.addr %s219, 2
        %s223 = sadd.s32 %s221, %s222
        %s224 = smul.addr %s223, 4
        %s225 = scalar_lea.vmem %s0, %s224
        %p226 = pneg %p54
        %p227 = pneg %p51
        %p228 = pneg %p75
        %p229 = pneg %p72
        %p230 = pneg %p96
        %p231 = pneg %p93
        %p232 = pneg %p117
        %p233 = pneg %p114
        %p234 = pneg %p138
        %p235 = pneg %p135
        %p236 = pneg %p166
        %p237 = pneg %p163
        %s238 = sand.u32 %s153, 1
        %s239 = scalar_lea.sflag [#allocation3], %s238
        %s240 = sand.u32 %s153, 1
        %s241 = smul.addr %s240, 8
        %s242 = scalar_lea.vmem [#allocation2], %s241
        %s243 = smul.u32 2, %s24
        %p244 = scmp.lt.s32.totalorder %s23, 1
        %s245 = scalar_select %p244, %s23, 1
        %p246 = scmp.lt.s32.totalorder %s243, 1
        %s247 = scalar_select %p246, %s243, 1
        %s248 = smul.addr %s245, 2
        %s249 = sadd.s32 %s247, %s248
        %s250 = smul.addr %s249, 4
        %s251 = scalar_lea.vmem %s0, %s250
        %s252 = smul.u32 2, %s24
        %s253 = smul.u32 2, %s24
        %v254 = vld [vmem:[%s251] sm:$0xff]
        %v255 = vld [vmem:[%s1] sm:$0xff]
        %v256 = vld [vmem:[%s2] sm:$0xff]
        %258 = vset.pattern.permute.xlu0 0
        %259 = vperm.xlu0 %258, %v256
        %v260 = vpop.permute.xlu0 %259
        %v263 = vcombine.high %v254, %v254
        %vm264 = vcmask 31744
        %v266 = vsel %vm264, %v255, 0
        %vm268 = vcmask 1043456
        %v269 = vsel %vm268, %v254, 0
        %v271 = vsel %vm268, %v263, 0
        %273 = vmatprep.subr.mxu0 %v271
        %274 = vmatpush1.msra.mxu0 %v269
        %275 = vmatprep.subr.mxu0 0.0
        %276 = vmatpush1.msra.mxu0 0.0
        %277 = vmatprep.subr.mxu0 0.0
        %278 = vmatpush1.msra.mxu0 0.0
        %279 = vmatprep.subr.mxu0 0.0
        %280 = vmatpush1.msra.mxu0 0.0
        %281 = vmatprep.subr.mxu0 0.0
        %282 = vmatpush1.msra.mxu0 0.0
        %283 = vmatprep.subr.mxu0 0.0
        %284 = vmatpush1.msra.mxu0 0.0
        %285 = vmatprep.subr.mxu0 0.0
        %286 = vmatpush1.msra.mxu0 0.0
        %287 = vmatprep.subr.mxu0 0.0
        %288 = vmatpush1.msra.mxu0 0.0
        %289 = vmatprep.subr.mxu0 0.0
        %290 = vmatpush1.msra.mxu0 0.0
        %291 = vmatprep.subr.mxu0 0.0
        %292 = vmatpush1.msra.mxu0 0.0
        %293 = vmatprep.subr.mxu0 0.0
        %294 = vmatpush1.msra.mxu0 0.0
        %295 = vmatprep.subr.mxu0 0.0
        %296 = vmatpush1.msra.mxu0 0.0
        %297 = vmatprep.subr.mxu0 0.0
        %298 = vmatpush1.msra.mxu0 0.0
        %299 = vmatprep.subr.mxu0 0.0
        %300 = vmatpush1.msra.mxu0 0.0
        %301 = vmatprep.subr.mxu0 0.0
        %302 = vmatpush1.msra.mxu0 0.0
        %303 = vmatprep.subr.mxu0 0.0
        %304 = vmatpush1.msra.mxu0 0.0
        %305 = vmatprep.subr.mxu0 0.0
        %306 = vmatpush1.msra.mxu0 0.0
        %307 = vmatprep.subr.mxu0 0.0
        %308 = vmatpush1.msra.mxu0 0.0
        %309 = vmatprep.subr.mxu0 0.0
        %310 = vmatpush1.msra.mxu0 0.0
        %311 = vmatprep.subr.mxu0 0.0
        %312 = vmatpush1.msra.mxu0 0.0
        %313 = vmatprep.subr.mxu0 0.0
        %314 = vmatpush1.msra.mxu0 0.0
        %315 = vmatprep.subr.mxu0 0.0
        %316 = vmatpush1.msra.mxu0 0.0
        %317 = vmatprep.subr.mxu0 0.0
        %318 = vmatpush1.msra.mxu0 0.0
        %319 = vmatprep.subr.mxu0 0.0
        %320 = vmatpush1.msra.mxu0 0.0
        %321 = vmatprep.subr.mxu0 0.0
        %322 = vmatpush1.msra.mxu0 0.0
        %323 = vmatprep.subr.mxu0 0.0
        %324 = vmatpush1.msra.mxu0 0.0
        %325 = vmatprep.subr.mxu0 0.0
        %326 = vmatpush1.msra.mxu0 0.0
        %327 = vmatprep.subr.mxu0 0.0
        %328 = vmatpush1.msra.mxu0 0.0
        %329 = vmatprep.subr.mxu0 0.0
        %330 = vmatpush1.msra.mxu0 0.0
        %331 = vmatprep.subr.mxu0 0.0
        %332 = vmatpush1.msra.mxu0 0.0
        %333 = vmatprep.subr.mxu0 0.0
        %334 = vmatpush1.msra.mxu0 0.0
        %335 = vmatprep.subr.mxu0 0.0
        %336 = vmatpush1.msra.mxu0 0.0
        %337 = vmatprep.mubr.f32.mxu0 0.0
        %338 = vmatmul.mubr.f32.gmra.mrb[0].mxu0 %v266
        %v339 = vpop.f32.mrb[0].mxu0
        %v340 = vadd.f32 %v260, %v339
        %v341 = vpop.f32.mrb[0].mxu0
        %v342 = vadd.f32 %v260, %v341
        %343 = vdwg.mxu0
        %v344 = vxor.u32 %v340, 2147483648
        %v345 = vxor.u32 %v342, 2147483648
        %v346 = vmul.f32 %v344, 1.442695
        %v347 = vpow.pop %v346
        %v348 = vmul.f32 %v345, 1.442695
        %v349 = vpow.pop %v348
        %v350 = vadd.f32 %v347, 1.0
        %v351 = vadd.f32 %v349, 1.0
        %v352 = vrcp.pop %v350
        %v353 = vmul.f32 1.0, %v352
        %v354 = vrcp.pop %v351
        %v355 = vmul.f32 1.0, %v354
        %v356 = vmul.f32 %v340, %v353
        %v357 = vmul.f32 %v342, %v355
        %v358 = vld [vmem:[%s3] sm:$0xf]
        %v359 = vld [vmem:[%s4] sm:$0xf]
        %361 = vset.pattern.permute.xlu0 0
        %362 = vperm.xlu0 %361, %v359
        %v363 = vpop.permute.xlu0 %362
        %vm365 = vcmask 64512
        %v367 = vsel %vm365, %v358, 0
        %369 = vmatprep.subr.mxu0 %v357
        %370 = vmatpush1.msra.mxu0 %v356
        %371 = vmatprep.subr.mxu0 0.0
        %372 = vmatpush1.msra.mxu0 0.0
        %373 = vmatprep.subr.mxu0 0.0
        %374 = vmatpush1.msra.mxu0 0.0
        %375 = vmatprep.subr.mxu0 0.0
        %376 = vmatpush1.msra.mxu0 0.0
        %377 = vmatprep.subr.mxu0 0.0
        %378 = vmatpush1.msra.mxu0 0.0
        %379 = vmatprep.subr.mxu0 0.0
        %380 = vmatpush1.msra.mxu0 0.0
        %381 = vmatprep.subr.mxu0 0.0
        %382 = vmatpush1.msra.mxu0 0.0
        %383 = vmatprep.subr.mxu0 0.0
        %384 = vmatpush1.msra.mxu0 0.0
        %385 = vmatprep.subr.mxu0 0.0
        %386 = vmatpush1.msra.mxu0 0.0
        %387 = vmatprep.subr.mxu0 0.0
        %388 = vmatpush1.msra.mxu0 0.0
        %389 = vmatprep.subr.mxu0 0.0
        %390 = vmatpush1.msra.mxu0 0.0
        %391 = vmatprep.subr.mxu0 0.0
        %392 = vmatpush1.msra.mxu0 0.0
        %393 = vmatprep.subr.mxu0 0.0
        %394 = vmatpush1.msra.mxu0 0.0
        %395 = vmatprep.subr.mxu0 0.0
        %396 = vmatpush1.msra.mxu0 0.0
        %397 = vmatprep.subr.mxu0 0.0
        %398 = vmatpush1.msra.mxu0 0.0
        %399 = vmatprep.subr.mxu0 0.0
        %400 = vmatpush1.msra.mxu0 0.0
        %401 = vmatprep.subr.mxu0 0.0
        %402 = vmatpush1.msra.mxu0 0.0
        %403 = vmatprep.subr.mxu0 0.0
        %404 = vmatpush1.msra.mxu0 0.0
        %405 = vmatprep.subr.mxu0 0.0
        %406 = vmatpush1.msra.mxu0 0.0
        %407 = vmatprep.subr.mxu0 0.0
        %408 = vmatpush1.msra.mxu0 0.0
        %409 = vmatprep.subr.mxu0 0.0
        %410 = vmatpush1.msra.mxu0 0.0
        %411 = vmatprep.subr.mxu0 0.0
        %412 = vmatpush1.msra.mxu0 0.0
        %413 = vmatprep.subr.mxu0 0.0
        %414 = vmatpush1.msra.mxu0 0.0
        %415 = vmatprep.subr.mxu0 0.0
        %416 = vmatpush1.msra.mxu0 0.0
        %417 = vmatprep.subr.mxu0 0.0
        %418 = vmatpush1.msra.mxu0 0.0
        %419 = vmatprep.subr.mxu0 0.0
        %420 = vmatpush1.msra.mxu0 0.0
        %421 = vmatprep.subr.mxu0 0.0
        %422 = vmatpush1.msra.mxu0 0.0
        %423 = vmatprep.subr.mxu0 0.0
        %424 = vmatpush1.msra.mxu0 0.0
        %425 = vmatprep.subr.mxu0 0.0
        %426 = vmatpush1.msra.mxu0 0.0
        %427 = vmatprep.subr.mxu0 0.0
        %428 = vmatpush1.msra.mxu0 0.0
        %429 = vmatprep.subr.mxu0 0.0
        %430 = vmatpush1.msra.mxu0 0.0
        %431 = vmatprep.subr.mxu0 0.0
        %432 = vmatpush1.msra.mxu0 0.0
        %433 = vmatprep.mubr.f32.mxu0 0.0
        %434 = vmatmul.mubr.f32.gmra.mrb[0].mxu0 %v367
        %v435 = vpop.f32.mrb[0].mxu0
        %v436 = vadd.f32 %v363, %v435
        %v437 = vpop.f32.mrb[0].mxu0
        %v438 = vadd.f32 %v363, %v437
        %439 = vdwg.mxu0
        %v442 = vcombine.low %v436, %v438
        %444 = vst [vmem:[%s242] sm:$0xff] %v442
        %s445 = sand.u32 %s153, 1
        %s446 = scalar_lea.sflag [#allocation3], %s445
        %s447 = sand.u32 %s153, 1
        %s448 = smul.addr %s447, 8
        %s449 = scalar_lea.vmem [#allocation2], %s448
        // Predicated region
        $region41: #{tpu_custom_call.1} parent=39 // pred_check
          %p450 = pneg %p163
        $region42: #{tpu_custom_call.1} parent=39 // pred_check_branch
          %452 = sbr.rel (%p450) target = $region44
        $region43: #{tpu_custom_call.1} parent=39 // pred_region
          %s453 = smul.u32 2, %s24
          %s455 = ssub.s32 128, 128
          %456 = vsyncadd %s446, %s455
          %s457 = smul.addr %s23, 2
          %s458 = sadd.s32 %s453, %s457
          %s459 = smul.addr %s458, 64
          %s460 = scalar_lea.hbm %s5, %s459
          %s462 = sshll.u32 %s449, 4
          %s463 = int_to_ptr.vmem [resolvable:$true] %s462
          %465 = dma.vmem_to_hbm [thread:$0]  %s463, 128, %s460, %s446
        $region44: #{tpu_custom_call.1} parent=39 // pred_fallthru
          _
      $region40: #{tpu_custom_call.1} parent=5 // pred_fallthru
        _
      %p466 = scmp.le.s32.totalorder 2, %s14
      // Predicated region
      $region45: #{tpu_custom_call.1} parent=5 // pred_check
        %p467 = pneg %p466
      $region46: #{tpu_custom_call.1} parent=5 // pred_check_branch
        %469 = sbr.rel (%p467) target = $region48
      $region47: #{tpu_custom_call.1} parent=5 // pred_region
        %s470 = ssub.s32 %s14, 2
        // Predicated region
        $region49: #{tpu_custom_call.1} parent=47 // pred_check
          %p471 = pneg %p169
        $region50: #{tpu_custom_call.1} parent=47 // pred_check_branch
          %473 = sbr.rel (%p471) target = $region52
        $region51: #{tpu_custom_call.1} parent=47 // pred_region
          %s474 = sand.u32 %s154, 1
          %s475 = scalar_lea.sflag [#allocation3], %s474
          %s476 = sand.u32 %s154, 1
          %s477 = smul.addr %s476, 8
          %s478 = scalar_lea.vmem [#allocation2], %s477
          %479 = dma.done %s475, 128
        $region52: #{tpu_custom_call.1} parent=47 // pred_fallthru
          _
      $region48: #{tpu_custom_call.1} parent=5 // pred_fallthru
        _
    $region6: #{tpu_custom_call.1} parent=1 // loop_footer
      %s18 = sadd.s32 1, %s14
    $region7: #{tpu_custom_call.1} parent=1 // loop_footer_branch
      %13 = sbr.rel target = $region3
    $region8: #{tpu_custom_call.1} parent=1 // loop_exit
      _
    %480 = vsyncpa [#allocation3], 1
    %s481 = scalar_lea.sflag [#allocation3], 1
    %482 = vsyncpa %s481, 1

</llo_original>
